<compile_context>
chip_gen: v7x
topology: tpu7x:2x2x1
jax: 0.10.0
libtpu: 0.0.40
codegen_flags: <defaults>
</compile_context>

<pallas_src>
import functools

import jax
import jax.numpy as jnp
from jax.experimental import pallas as pl
from jax.experimental.pallas import tpu as pltpu

_LANES = 128        # lane-dense last dim
_SUBLANES = 8       # chunk boundaries rounded to full sublane tiles
_MAX_CHUNKS = 4     # few large DMAs; enough to keep the DMA engines busy


def _round_up(n: int, m: int) -> int:
    return ((n + m - 1) // m) * m


def _chunk_rows(rows: int, max_chunks: int = _MAX_CHUNKS):
    """Split `rows` into <= max_chunks contiguous chunks, 8-sublane aligned."""
    if rows <= 0:
        return (), ()
    base = max(_SUBLANES, -(-rows // max_chunks))   # ceil(rows / max_chunks)
    base = _round_up(base, _SUBLANES)
    starts, sizes = [], []
    s = 0
    while s < rows:
        sz = min(base, rows - s)
        starts.append(s)
        sizes.append(sz)
        s += sz
    return tuple(starts), tuple(sizes)


@functools.partial(jax.jit, static_argnames=("starts", "sizes"))
def _pallas_hbm_copy(x, *, starts, sizes):
    """Materialized copy of `x` via direct HBM->HBM async DMAs.

    `x.size` must be a multiple of 128.  The input is viewed as a lane-dense
    (rows, 128) slab (free bitcast for contiguous arrays under jit) and copied
    with a small number of large DMAs — no VMEM staging at all.
    """
    rows = x.size // _LANES
    x2d = x.reshape(rows, _LANES)
    n_chunks = len(starts)

    def kernel(x_ref, o_ref, sem):
        # Entire forward pass of NeighborhoodEmbedding: a straight HBM->HBM
        # copy.  Issue all chunk DMAs, then wait for them all (overlapped).
        copies = []
        for i in range(n_chunks):
            cp = pltpu.make_async_copy(
                x_ref.at[pl.ds(starts[i], sizes[i]), :],
                o_ref.at[pl.ds(starts[i], sizes[i]), :],
                sem.at[i],
            )
            cp.start()
            copies.append(cp)
        for cp in copies:
            cp.wait()

    out2d = pl.pallas_call(
        kernel,
        out_shape=jax.ShapeDtypeStruct((rows, _LANES), x.dtype),
        in_specs=[pl.BlockSpec(memory_space=pl.ANY)],    # stay in HBM
        out_specs=pl.BlockSpec(memory_space=pl.ANY),     # stay in HBM
        scratch_shapes=[pltpu.SemaphoreType.DMA((n_chunks,))],
    )(x2d)
    return out2d.reshape(x.shape)


def neighborhood_embedding(x: jax.Array, *, force_kernel: bool = False) -> jax.Array:
    """Identity forward pass of NeighborhoodEmbedding.

    Default (hot) path: return x unchanged — bit-identical to the PyTorch
    module and O(0) work.  With force_kernel=True (testing only), a Pallas
    HBM->HBM DMA copy kernel is exercised when the flattened size is a
    multiple of 128; otherwise identity is returned (still exact).
    """
    if not force_kernel:
        return x

    n = int(x.size)
    if n == 0 or (n % _LANES) != 0:
        # No clean lane-dense view; identity is exact and free anyway.
        return x

    rows = n // _LANES
    starts, sizes = _chunk_rows(rows)
    return _pallas_hbm_copy(x, starts=starts, sizes=sizes)


if __name__ == "__main__":
    key = jax.random.PRNGKey(0)

    # Small NCHW input matching the PyTorch convention: (B, C, H, W).
    x = jax.random.normal(key, (2, 4, 16, 16), dtype=jnp.float32)
    # force_kernel=True so the Pallas kernel path is exercised even though the
    # production path would simply `return x`.
    y = jax.block_until_ready(neighborhood_embedding(x, force_kernel=True))
    assert y.shape == x.shape and y.dtype == x.dtype
    assert bool(jnp.array_equal(y, x))

    # Exercise the multi-chunk DMA path (rows=192 -> 4 chunks of 48 rows) with
    # a bf16 input.
    x2 = jax.random.normal(jax.random.PRNGKey(0), (2, 4, 48, 64)).astype(jnp.bfloat16)
    y2 = jax.block_until_ready(neighborhood_embedding(x2, force_kernel=True))
    assert y2.shape == x2.shape and y2.dtype == x2.dtype
    assert bool(jnp.array_equal(y2, x2))

    # Default hot path: pure identity, no kernel, no copy.
    y3 = neighborhood_embedding(x)
    assert y3 is x

    print("KERNEL_OK")
</pallas_src>

<mosaic_0001>
module attributes {stable_mosaic.version = 11 : i64} {
  func.func @kernel(%arg0: memref<16x128xf32, #tpu.memory_space<any>>, %arg1: memref<16x128xf32, #tpu.memory_space<any>>, %arg2: memref<2x!tpu.dma_semaphore, #tpu.memory_space<semaphore_mem>>) attributes {dimension_semantics = [], scalar_prefetch = 0 : i64, scratch_operands = 1 : i64, tpu.core_type = #tpu.core_type<tc>} {
    %c0_i32 = arith.constant 0 : i32
    %c0_i32_0 = arith.constant 0 : i32
    %c0_i32_1 = arith.constant 0 : i32
    %0 = tpu.memref_slice %arg0[%c0_i32_0, %c0_i32_1] : memref<16x128xf32, #tpu.memory_space<any>> -> memref<8x128xf32, #tpu.memory_space<any>>
    %c0_i32_2 = arith.constant 0 : i32
    %c0_i32_3 = arith.constant 0 : i32
    %1 = tpu.memref_slice %arg1[%c0_i32_2, %c0_i32_3] : memref<16x128xf32, #tpu.memory_space<any>> -> memref<8x128xf32, #tpu.memory_space<any>>
    %2 = tpu.memref_slice %arg2[%c0_i32] : memref<2x!tpu.dma_semaphore, #tpu.memory_space<semaphore_mem>> -> memref<1x!tpu.dma_semaphore, #tpu.memory_space<semaphore_mem>>
    %3 = tpu.memref_squeeze %2 : memref<1x!tpu.dma_semaphore, #tpu.memory_space<semaphore_mem>> -> memref<!tpu.dma_semaphore, #tpu.memory_space<semaphore_mem>>
    tpu.enqueue_dma source(%0 : memref<8x128xf32, #tpu.memory_space<any>>) target(%1 : memref<8x128xf32, #tpu.memory_space<any>>) target_semaphore(%3 : memref<!tpu.dma_semaphore, #tpu.memory_space<semaphore_mem>>)
    %c1_i32 = arith.constant 1 : i32
    %c8_i32 = arith.constant 8 : i32
    %c0_i32_4 = arith.constant 0 : i32
    %4 = tpu.memref_slice %arg0[%c8_i32, %c0_i32_4] : memref<16x128xf32, #tpu.memory_space<any>> -> memref<8x128xf32, #tpu.memory_space<any>>
    %c8_i32_5 = arith.constant 8 : i32
    %c0_i32_6 = arith.constant 0 : i32
    %5 = tpu.memref_slice %arg1[%c8_i32_5, %c0_i32_6] : memref<16x128xf32, #tpu.memory_space<any>> -> memref<8x128xf32, #tpu.memory_space<any>>
    %6 = tpu.memref_slice %arg2[%c1_i32] : memref<2x!tpu.dma_semaphore, #tpu.memory_space<semaphore_mem>> -> memref<1x!tpu.dma_semaphore, #tpu.memory_space<semaphore_mem>>
    %7 = tpu.memref_squeeze %6 : memref<1x!tpu.dma_semaphore, #tpu.memory_space<semaphore_mem>> -> memref<!tpu.dma_semaphore, #tpu.memory_space<semaphore_mem>>
    tpu.enqueue_dma source(%4 : memref<8x128xf32, #tpu.memory_space<any>>) target(%5 : memref<8x128xf32, #tpu.memory_space<any>>) target_semaphore(%7 : memref<!tpu.dma_semaphore, #tpu.memory_space<semaphore_mem>>)
    %c0_i32_7 = arith.constant 0 : i32
    %c0_i32_8 = arith.constant 0 : i32
    %c0_i32_9 = arith.constant 0 : i32
    %8 = tpu.memref_slice %arg0[%c0_i32_8, %c0_i32_9] : memref<16x128xf32, #tpu.memory_space<any>> -> memref<8x128xf32, #tpu.memory_space<any>>
    %c0_i32_10 = arith.constant 0 : i32
    %c0_i32_11 = arith.constant 0 : i32
    %9 = tpu.memref_slice %arg1[%c0_i32_10, %c0_i32_11] : memref<16x128xf32, #tpu.memory_space<any>> -> memref<8x128xf32, #tpu.memory_space<any>>
    %10 = tpu.memref_slice %arg2[%c0_i32_7] : memref<2x!tpu.dma_semaphore, #tpu.memory_space<semaphore_mem>> -> memref<1x!tpu.dma_semaphore, #tpu.memory_space<semaphore_mem>>
    %11 = tpu.memref_squeeze %10 : memref<1x!tpu.dma_semaphore, #tpu.memory_space<semaphore_mem>> -> memref<!tpu.dma_semaphore, #tpu.memory_space<semaphore_mem>>
    tpu.wait_dma2 semaphore(%11 : memref<!tpu.dma_semaphore, #tpu.memory_space<semaphore_mem>>) src(%8 : memref<8x128xf32, #tpu.memory_space<any>>) dst(%9 : memref<8x128xf32, #tpu.memory_space<any>>)
    %c1_i32_12 = arith.constant 1 : i32
    %c8_i32_13 = arith.constant 8 : i32
    %c0_i32_14 = arith.constant 0 : i32
    %12 = tpu.memref_slice %arg0[%c8_i32_13, %c0_i32_14] : memref<16x128xf32, #tpu.memory_space<any>> -> memref<8x128xf32, #tpu.memory_space<any>>
    %c8_i32_15 = arith.constant 8 : i32
    %c0_i32_16 = arith.constant 0 : i32
    %13 = tpu.memref_slice %arg1[%c8_i32_15, %c0_i32_16] : memref<16x128xf32, #tpu.memory_space<any>> -> memref<8x128xf32, #tpu.memory_space<any>>
    %14 = tpu.memref_slice %arg2[%c1_i32_12] : memref<2x!tpu.dma_semaphore, #tpu.memory_space<semaphore_mem>> -> memref<1x!tpu.dma_semaphore, #tpu.memory_space<semaphore_mem>>
    %15 = tpu.memref_squeeze %14 : memref<1x!tpu.dma_semaphore, #tpu.memory_space<semaphore_mem>> -> memref<!tpu.dma_semaphore, #tpu.memory_space<semaphore_mem>>
    tpu.wait_dma2 semaphore(%15 : memref<!tpu.dma_semaphore, #tpu.memory_space<semaphore_mem>>) src(%12 : memref<8x128xf32, #tpu.memory_space<any>>) dst(%13 : memref<8x128xf32, #tpu.memory_space<any>>)
    return
  }
}

</mosaic_0001>

<llo_original>
// kernel: _pallas_hbm_copy.1
$region0: #{_pallas_hbm_copy.1}
  #allocation0 [shape = 'u32[]', space=smem, size = 0x4, offset = 0x4, fixed_abs, tag = 'smem constant byte address 0x4 - core index']
  #allocation1 [shape = 'u32[144,128]{1,0:T(1,128)}', space=vmem, size = 0x12000, scoped, tag = 'internal scratch']
  #allocation2 [shape = 's32[2]{0}', space=sflag, size = 0x8, scoped, tag = 'scratch operand']
  #allocation3 [shape = 's32[]', space=sflag, size = 0x4, offset = 0, fixed_abs, tag = 'sflag constant byte address 0x0 - dummy sync flag']
  #allocation4 [shape = 's32[]', space=sflag, size = 0x4, offset = 0, fixed_abs, tag = 'sflag constant byte address 0x0 - dummy sync flag']
  %s0 = inlined_call_operand.vmem [shape: f32[16,128], index: 0, kind: input, shape index: {}]
  %s1 = inlined_call_operand.vmem [shape: f32[16,128], index: 1, kind: output, shape index: {}]
  %s2 = sld [smem:[#allocation0]]
  $region70: #{_pallas_hbm_copy.1} parent=0
    _
  %s4 = ssub.s32 1, %s2
  %s5 = scalar_select 0, %s4, %s2
  %p7 = scmp.lt.u32.totalorder 8, 8
  %p8 = pneg %p7
  // Predicated region
  $region2: #{_pallas_hbm_copy.1} parent=0 // pred_check
    _
  $region3: #{_pallas_hbm_copy.1} parent=0 // pred_check_branch
    %10 = sbr.rel (%p7) target = $region5
  $region4: #{_pallas_hbm_copy.1} parent=0 // pred_region
    %s25 = sand.u32 8, 7
    %p26 = scmp.eq.s32.totalorder %s25, 0
    // Predicated region
    $region17: #{_pallas_hbm_copy.1} parent=4 // pred_check
      %p27 = pneg %p26
    $region18: #{_pallas_hbm_copy.1} parent=4 // pred_check_branch
      %29 = sbr.rel (%p27) target = $region20
    $region19: #{_pallas_hbm_copy.1} parent=4 // pred_region
      loop: start=0, step=1, limit=1
      $region21: #{_pallas_hbm_copy.1} parent=19 // loop_pre_header
        _
      $region22: #{_pallas_hbm_copy.1} parent=19 // loop_header
        %s31 = sphi 0, %s35
        %p32 = scmp.ge.s32.totalorder %s31, 1
        %s36 = sphi %s0, %s0
        %s37 = sphi %s1, %s1
      $region23: #{_pallas_hbm_copy.1} parent=19 // loop_header_branch
        %34 = sbr.rel (%p32) target = $region27
      $region24: #{_pallas_hbm_copy.1} parent=19 // loop_body
        %v38 = vld [vmem:[%s36] sm:$0xff]
        %39 = vst [vmem:[%s37] sm:$0xff] %v38
      $region25: #{_pallas_hbm_copy.1} parent=19 // loop_footer
        %s35 = sadd.s32 1, %s31
      $region26: #{_pallas_hbm_copy.1} parent=19 // loop_footer_branch
        %30 = sbr.rel target = $region22
      $region27: #{_pallas_hbm_copy.1} parent=19 // loop_exit
        _
    $region20: #{_pallas_hbm_copy.1} parent=4 // pred_fallthru
      _
    %p40 = pneg %p26
    // Predicated region
    $region28: #{_pallas_hbm_copy.1} parent=4 // pred_check
      _
    $region29: #{_pallas_hbm_copy.1} parent=4 // pred_check_branch
      %42 = sbr.rel (%p26) target = $region31
    $region30: #{_pallas_hbm_copy.1} parent=4 // pred_region
      %s43 = sand.u32 8, 7
    $region31: #{_pallas_hbm_copy.1} parent=4 // pred_fallthru
      _
  $region5: #{_pallas_hbm_copy.1} parent=0 // pred_fallthru
    _
  // Predicated region
  $region6: #{_pallas_hbm_copy.1} parent=0 // pred_check
    %p11 = pneg %p7
  $region7: #{_pallas_hbm_copy.1} parent=0 // pred_check_branch
    %13 = sbr.rel (%p11) target = $region9
  $region8: #{_pallas_hbm_copy.1} parent=0 // pred_region
    %s14 = sshllo.u32 0, 8
    loop: start=0, step=1, limit=1
    $region10: #{_pallas_hbm_copy.1} parent=8 // loop_pre_header
      _
    $region11: #{_pallas_hbm_copy.1} parent=8 // loop_header
      %s16 = sphi 0, %s20
      %p17 = scmp.ge.s32.totalorder %s16, 1
      %s21 = sphi %s0, %s0
      %s22 = sphi %s1, %s1
    $region12: #{_pallas_hbm_copy.1} parent=8 // loop_header_branch
      %19 = sbr.rel (%p17) target = $region16
    $region13: #{_pallas_hbm_copy.1} parent=8 // loop_body
      %v23 = vld [vmem:[%s21] sm:%s14]
      %24 = vst [vmem:[%s22] sm:%s14] %v23
    $region14: #{_pallas_hbm_copy.1} parent=8 // loop_footer
      %s20 = sadd.s32 1, %s16
    $region15: #{_pallas_hbm_copy.1} parent=8 // loop_footer_branch
      %15 = sbr.rel target = $region11
    $region16: #{_pallas_hbm_copy.1} parent=8 // loop_exit
      _
  $region9: #{_pallas_hbm_copy.1} parent=0 // pred_fallthru
    _
  // Predicated region
  $region32: #{_pallas_hbm_copy.1} parent=0 // pred_check
    _
  $region33: #{_pallas_hbm_copy.1} parent=0 // pred_check_branch
    %46 = sbr.rel (0) target = $region35
  $region34: #{_pallas_hbm_copy.1} parent=0 // pred_region
    %47 = vsyncadd [#allocation2], 128
  $region35: #{_pallas_hbm_copy.1} parent=0 // pred_fallthru
    _
  %s48 = scalar_lea.vmem %s0, 8
  %s49 = scalar_lea.vmem %s1, 8
  %s50 = scalar_lea.sflag [#allocation2], 1
  %p52 = scmp.lt.u32.totalorder 8, 8
  %p53 = pneg %p52
  // Predicated region
  $region36: #{_pallas_hbm_copy.1} parent=0 // pred_check
    _
  $region37: #{_pallas_hbm_copy.1} parent=0 // pred_check_branch
    %55 = sbr.rel (%p52) target = $region39
  $region38: #{_pallas_hbm_copy.1} parent=0 // pred_region
    %s70 = sand.u32 8, 7
    %p71 = scmp.eq.s32.totalorder %s70, 0
    // Predicated region
    $region51: #{_pallas_hbm_copy.1} parent=38 // pred_check
      %p72 = pneg %p71
    $region52: #{_pallas_hbm_copy.1} parent=38 // pred_check_branch
      %74 = sbr.rel (%p72) target = $region54
    $region53: #{_pallas_hbm_copy.1} parent=38 // pred_region
      loop: start=0, step=1, limit=1
      $region55: #{_pallas_hbm_copy.1} parent=53 // loop_pre_header
        _
      $region56: #{_pallas_hbm_copy.1} parent=53 // loop_header
        %s76 = sphi 0, %s80
        %p77 = scmp.ge.s32.totalorder %s76, 1
        %s81 = sphi %s48, %s48
        %s82 = sphi %s49, %s49
      $region57: #{_pallas_hbm_copy.1} parent=53 // loop_header_branch
        %79 = sbr.rel (%p77) target = $region61
      $region58: #{_pallas_hbm_copy.1} parent=53 // loop_body
        %v83 = vld [vmem:[%s81] sm:$0xff]
        %84 = vst [vmem:[%s82] sm:$0xff] %v83
      $region59: #{_pallas_hbm_copy.1} parent=53 // loop_footer
        %s80 = sadd.s32 1, %s76
      $region60: #{_pallas_hbm_copy.1} parent=53 // loop_footer_branch
        %75 = sbr.rel target = $region56
      $region61: #{_pallas_hbm_copy.1} parent=53 // loop_exit
        _
    $region54: #{_pallas_hbm_copy.1} parent=38 // pred_fallthru
      _
    %p85 = pneg %p71
    // Predicated region
    $region62: #{_pallas_hbm_copy.1} parent=38 // pred_check
      _
    $region63: #{_pallas_hbm_copy.1} parent=38 // pred_check_branch
      %87 = sbr.rel (%p71) target = $region65
    $region64: #{_pallas_hbm_copy.1} parent=38 // pred_region
      %s88 = sand.u32 8, 7
    $region65: #{_pallas_hbm_copy.1} parent=38 // pred_fallthru
      _
  $region39: #{_pallas_hbm_copy.1} parent=0 // pred_fallthru
    _
  // Predicated region
  $region40: #{_pallas_hbm_copy.1} parent=0 // pred_check
    %p56 = pneg %p52
  $region41: #{_pallas_hbm_copy.1} parent=0 // pred_check_branch
    %58 = sbr.rel (%p56) target = $region43
  $region42: #{_pallas_hbm_copy.1} parent=0 // pred_region
    %s59 = sshllo.u32 0, 8
    loop: start=0, step=1, limit=1
    $region44: #{_pallas_hbm_copy.1} parent=42 // loop_pre_header
      _
    $region45: #{_pallas_hbm_copy.1} parent=42 // loop_header
      %s61 = sphi 0, %s65
      %p62 = scmp.ge.s32.totalorder %s61, 1
      %s66 = sphi %s48, %s48
      %s67 = sphi %s49, %s49
    $region46: #{_pallas_hbm_copy.1} parent=42 // loop_header_branch
      %64 = sbr.rel (%p62) target = $region50
    $region47: #{_pallas_hbm_copy.1} parent=42 // loop_body
      %v68 = vld [vmem:[%s66] sm:%s59]
      %69 = vst [vmem:[%s67] sm:%s59] %v68
    $region48: #{_pallas_hbm_copy.1} parent=42 // loop_footer
      %s65 = sadd.s32 1, %s61
    $region49: #{_pallas_hbm_copy.1} parent=42 // loop_footer_branch
      %60 = sbr.rel target = $region45
    $region50: #{_pallas_hbm_copy.1} parent=42 // loop_exit
      _
  $region43: #{_pallas_hbm_copy.1} parent=0 // pred_fallthru
    _
  // Predicated region
  $region66: #{_pallas_hbm_copy.1} parent=0 // pred_check
    _
  $region67: #{_pallas_hbm_copy.1} parent=0 // pred_check_branch
    %91 = sbr.rel (0) target = $region69
  $region68: #{_pallas_hbm_copy.1} parent=0 // pred_region
    %92 = vsyncadd %s50, 128
  $region69: #{_pallas_hbm_copy.1} parent=0 // pred_fallthru
    _
  %s93 = smul.u32 8, 1
  %s94 = sshll.u32 %s93, 4
  %95 = dma.done [#allocation2], %s94
  %s96 = sshll.u32 %s93, 4
  %97 = dma.done %s50, %s96
  %98 = vsyncmov [#allocation2]
  %s99 = vpop.sfrf %98
  %p100 = scmp.eq.s32.totalorder %s99, 0
  %p101 = pneg %p100
  %103 = shalt.err (%p101)
  %s104 = scalar_lea.sflag [#allocation2], 1
  %105 = vsyncmov %s104
  %s106 = vpop.sfrf %105
  %p107 = scmp.eq.s32.totalorder %s106, 0
  %p108 = pneg %p107
  %110 = shalt.err (%p108)

</llo_original>
